<compile_context>
chip_gen: v7x
topology: tpu7x:2x2x1
jax: 0.10.0
libtpu: 0.0.40
codegen_flags: <defaults>
</compile_context>

<pallas_src>
import math

import jax
import jax.numpy as jnp
from jax import lax
from jax.experimental import pallas as pl
from jax.experimental.pallas import tpu as pltpu

_INV_SQRT2 = 1.0 / math.sqrt(2.0)


def _round_up(x, m):
    return ((x + m - 1) // m) * m


def _pad_axis(a, axis, target):
    pad = target - a.shape[axis]
    if pad == 0:
        return a
    widths = [(0, 0)] * a.ndim
    widths[axis] = (0, pad)
    return jnp.pad(a, widths)


def _sublane_granule(dtype):
    # 8 rows for 4-byte dtypes, 16 for 2-byte (bf16 packing), 32 for 1-byte.
    return max(8, 32 // jnp.dtype(dtype).itemsize)


def _vmem_budget_bytes():
    """Per-kernel VMEM budget derived from the chip's physical capacity."""
    cap = 128 * 1024 * 1024
    try:
        cap = int(getattr(pltpu.get_tpu_info(), "vmem_capacity_bytes", cap))
    except Exception:
        pass
    # Leave ~1/8 headroom for compiler-internal scratch; never ask for more
    # than 112 MiB even on 128 MiB parts.
    return min(cap - cap // 8, 112 * 1024 * 1024)


def _gelu_erf(h):
    # Exact erf GELU (torch.nn.GELU() default).  If exact parity were not
    # required, the tanh approximation would halve VALU/EUP work on v6e/v7x.
    return 0.5 * h * (1.0 + lax.erf(h * _INV_SQRT2))


def mlp_kernel_accout(x_ref, w1_ref, b1_ref, w2_ref, b2_ref, o_ref):
    """f32 output: accumulate fc2 partials directly into the resident output
    block (its index map ignores the H axis) -- saves the tm*Np*4B scratch."""
    h_idx = pl.program_id(1)

    @pl.when(h_idx == 0)
    def _init():
        o_ref[...] = jnp.zeros_like(o_ref)

    x = x_ref[...].astype(w1_ref.dtype)          # in-kernel cast (no host HBM pass)
    h = jnp.dot(x, w1_ref[...], preferred_element_type=jnp.float32)
    h = _gelu_erf(h + b1_ref[...])               # (1, th) bias broadcasts over rows
    o_ref[...] += jnp.dot(h.astype(w2_ref.dtype), w2_ref[...],
                          preferred_element_type=jnp.float32)

    @pl.when(h_idx == pl.num_programs(1) - 1)
    def _finalize():
        # Dropout(p=0.0) == identity (eval semantics).
        # TODO(synk): for drop_rate > 0 in training mode, add pltpu.prng_seed +
        # pltpu.prng_random_bits masking before the store.
        o_ref[...] = o_ref[...] + b2_ref[...]


def mlp_kernel_scratch(x_ref, w1_ref, b1_ref, w2_ref, b2_ref, o_ref, acc_ref):
    """Non-f32 outputs: f32 VMEM accumulator, cast once on the final H step."""
    h_idx = pl.program_id(1)

    @pl.when(h_idx == 0)
    def _init():
        acc_ref[...] = jnp.zeros_like(acc_ref)

    x = x_ref[...].astype(w1_ref.dtype)
    h = jnp.dot(x, w1_ref[...], preferred_element_type=jnp.float32)
    h = _gelu_erf(h + b1_ref[...])
    acc_ref[...] += jnp.dot(h.astype(w2_ref.dtype), w2_ref[...],
                            preferred_element_type=jnp.float32)

    @pl.when(h_idx == pl.num_programs(1) - 1)
    def _finalize():
        o_ref[...] = (acc_ref[...] + b2_ref[...]).astype(o_ref.dtype)


def prepare_mlp_params(w1, b1, w2, b2, *, mxu_dtype=jnp.bfloat16):
    """Pad hidden/output dims to lane multiples (128) and cast weights to the
    MXU dtype ONCE, outside the per-call hot path.  Zero-padded rows/cols are
    harmless: GELU(0) = 0 and the padded W2 rows are zero."""
    K, H = w1.shape
    N = w2.shape[1]
    Hp = _round_up(H, 128)
    Np = _round_up(N, 128)
    return dict(
        w1=_pad_axis(w1, 1, Hp).astype(mxu_dtype),
        b1=_pad_axis(b1, 0, Hp).astype(jnp.float32).reshape(1, Hp),
        w2=_pad_axis(_pad_axis(w2, 0, Hp), 1, Np).astype(mxu_dtype),
        b2=_pad_axis(b2, 0, Np).astype(jnp.float32).reshape(1, Np),
        K=K, H=H, N=N, Hp=Hp, Np=Np,
    )


def mlp_forward(x, params, *, tm=512, th=512):
    """x: (M, K); params from prepare_mlp_params.  Returns (M, N) in x.dtype."""
    M, K = x.shape
    assert K == params["K"]
    H, Hp, N, Np = params["H"], params["Hp"], params["N"], params["Np"]
    w1p, b1p, w2p, b2p = params["w1"], params["b1"], params["w2"], params["b2"]
    out_dtype = x.dtype
    w_itemsize = jnp.dtype(w1p.dtype).itemsize
    use_acc_scratch = out_dtype != jnp.float32

    vmem_budget = _vmem_budget_bytes()

    # ---- row tile: sets flops-per-weight-byte; keep it as large as possible ----
    sub = max(_sublane_granule(x.dtype), _sublane_granule(out_dtype))
    Mp_min = _round_up(M, sub)
    tm = _round_up(tm, sub)
    if Mp_min >= tm:
        tm_eff = tm
    elif Mp_min >= 2 * sub:
        # Small M: expose >= 2 row tiles so the 'parallel' M axis can shard
        # across both TensorCores on megacore (v7x) parts.
        tm_eff = _round_up((Mp_min + 1) // 2, sub)
    else:
        tm_eff = Mp_min
    Mp = _round_up(Mp_min, tm_eff)

    # ---- hidden tile: reduction axis; does not change arithmetic intensity ----
    q = Hp // 128
    th_divs = sorted(128 * d for d in range(1, q + 1) if q % d == 0)
    if (K * Hp + Hp * Np) * w_itemsize <= 16 * 1024 * 1024:
        # Whole hidden dim in one step -> W1/W2/b1 block indices are constant,
        # so the weights are DMA'd from HBM exactly once for the entire call.
        th_eff = Hp
    else:
        th_eff = max(t for t in th_divs if t <= max(_round_up(th, 128), 128))

    def working_set(tm_, th_):
        est = 2 * tm_ * K * jnp.dtype(x.dtype).itemsize        # x (double-buffered)
        est += 2 * K * th_ * w_itemsize                        # W1 tiles
        est += 2 * th_ * 4                                     # b1
        est += 2 * th_ * Np * w_itemsize                       # W2 tiles
        est += 2 * Np * 4                                      # b2
        est += 2 * tm_ * Np * jnp.dtype(out_dtype).itemsize    # out tiles
        if use_acc_scratch:
            est += tm_ * Np * 4                                # f32 accumulator
        return est

    # Fit the VMEM budget: shrink th first (only adds ~0.35us/step overhead),
    # shrink tm only as a last resort (it re-exposes weight DMA).
    while th_eff > th_divs[0] and working_set(tm_eff, th_eff) > vmem_budget:
        th_eff = max(t for t in th_divs if t < th_eff)
    while tm_eff > sub and working_set(tm_eff, th_eff) > vmem_budget:
        tm_eff = max(sub, _round_up(tm_eff // 2, sub))
        Mp = _round_up(Mp_min, tm_eff)
    # TODO(synk): for very wide outputs (Np >= 8192) on v7x (64 MiB VMEM), add an
    # innermost N grid axis and stash the (tm, th) GELU output in VMEM scratch.

    xp = _pad_axis(x, 0, Mp)                    # no host-side dtype cast of x
    grid = (Mp // tm_eff, Hp // th_eff)

    w_streams = 1 if grid[1] == 1 else grid[0]  # constant-index blocks fetch once
    cost = pl.CostEstimate(
        flops=2 * M * K * H + 2 * M * H * N,
        transcendentals=M * H,
        bytes_accessed=(
            Mp * K * jnp.dtype(x.dtype).itemsize
            + w_streams * (w1p.size + w2p.size) * w_itemsize
            + w_streams * (b1p.size + b2p.size) * 4
            + Mp * Np * jnp.dtype(out_dtype).itemsize
        ),
    )

    kernel = mlp_kernel_scratch if use_acc_scratch else mlp_kernel_accout
    scratch = [pltpu.VMEM((tm_eff, Np), jnp.float32)] if use_acc_scratch else []

    out_p = pl.pallas_call(
        kernel,
        out_shape=jax.ShapeDtypeStruct((Mp, Np), out_dtype),
        grid_spec=pltpu.PrefetchScalarGridSpec(
            num_scalar_prefetch=0,
            grid=grid,
            in_specs=[
                pl.BlockSpec((tm_eff, K), lambda i, h: (i, 0)),    # x row tile
                pl.BlockSpec((K, th_eff), lambda i, h: (0, h)),    # W1 H-tile
                pl.BlockSpec((1, th_eff), lambda i, h: (0, h)),    # b1 H-tile
                pl.BlockSpec((th_eff, Np), lambda i, h: (h, 0)),   # W2 H-tile
                pl.BlockSpec((1, Np), lambda i, h: (0, 0)),        # b2 (full)
            ],
            out_specs=pl.BlockSpec((tm_eff, Np), lambda i, h: (i, 0)),
            scratch_shapes=scratch,
        ),
        compiler_params=pltpu.CompilerParams(
            dimension_semantics=("parallel", "arbitrary"),
            vmem_limit_bytes=int(vmem_budget),
        ),
        cost_estimate=cost,
    )(xp, w1p, b1p, w2p, b2p)

    return out_p[:M, :N]


def mlp_reference(x, w1, b1, w2, b2):
    h = x @ w1 + b1
    h = 0.5 * h * (1.0 + lax.erf(h * _INV_SQRT2))
    return h @ w2 + b2


if __name__ == "__main__":
    # Small shapes consistent with the module: batch=2, seq=8, in=32, hidden=64, out=32.
    batch, seq = 2, 8
    in_features, hidden_features, out_features = 32, 64, 32

    key = jax.random.PRNGKey(0)
    kx, kw1, kb1, kw2, kb2 = jax.random.split(key, 5)
    x = jax.random.normal(kx, (batch, seq, in_features), dtype=jnp.float32)

    # Deterministic init mimicking nn.Linear (uniform +-1/sqrt(fan_in));
    # weights stored pre-transposed relative to PyTorch's (out, in) convention.
    lim1 = 1.0 / math.sqrt(in_features)
    lim2 = 1.0 / math.sqrt(hidden_features)
    w1 = jax.random.uniform(kw1, (in_features, hidden_features),
                            minval=-lim1, maxval=lim1, dtype=jnp.float32)
    b1 = jax.random.uniform(kb1, (hidden_features,),
                            minval=-lim1, maxval=lim1, dtype=jnp.float32)
    w2 = jax.random.uniform(kw2, (hidden_features, out_features),
                            minval=-lim2, maxval=lim2, dtype=jnp.float32)
    b2 = jax.random.uniform(kb2, (out_features,),
                            minval=-lim2, maxval=lim2, dtype=jnp.float32)

    x2d = x.reshape(batch * seq, in_features)           # glue: flatten tokens
    ref = mlp_reference(x2d, w1, b1, w2, b2)

    # 1) Default path: bf16 MXU operands, f32 accumulation, f32 output
    #    (output block doubles as the accumulator; no VMEM scratch).
    params_bf16 = prepare_mlp_params(w1, b1, w2, b2, mxu_dtype=jnp.bfloat16)
    out_bf16 = mlp_forward(x2d, params_bf16)
    jax.block_until_ready(out_bf16)
    assert out_bf16.shape == (batch * seq, out_features)
    assert jnp.allclose(out_bf16, ref, atol=3e-2, rtol=3e-2), "bf16-MXU path mismatch"

    # 2) f32 MXU path (documented precision option; closer to torch f32 parity).
    params_f32 = prepare_mlp_params(w1, b1, w2, b2, mxu_dtype=jnp.float32)
    out_f32 = mlp_forward(x2d, params_f32)
    jax.block_until_ready(out_f32)
    assert jnp.allclose(out_f32, ref, atol=2e-2, rtol=2e-2), "f32-MXU path mismatch"

    # 3) bf16 output path (exercises the f32-scratch accumulator kernel).
    out_b16o = mlp_forward(x2d.astype(jnp.bfloat16), params_bf16)
    jax.block_until_ready(out_b16o)
    assert out_b16o.dtype == jnp.bfloat16
    assert jnp.allclose(out_b16o.astype(jnp.float32), ref, atol=1.5e-1, rtol=1.5e-1), \
        "bf16-output path mismatch"

    out = out_bf16.reshape(batch, seq, out_features)     # glue: restore (B, S, N)
    jax.block_until_ready(out)
    print("KERNEL_OK")
</pallas_src>

<mosaic_0001>
module attributes {stable_mosaic.version = 11 : i64} {
  func.func @mlp_kernel_accout(%arg0: i32, %arg1: i32, %arg2: memref<8x32xf32, #tpu.memory_space<vmem>>, %arg3: memref<32x128xbf16, #tpu.memory_space<vmem>>, %arg4: memref<1x128xf32, #tpu.memory_space<vmem>>, %arg5: memref<128x128xbf16, #tpu.memory_space<vmem>>, %arg6: memref<1x128xf32, #tpu.memory_space<vmem>>, %arg7: memref<8x128xf32, #tpu.memory_space<vmem>>) attributes {dimension_semantics = [#tpu.dimension_semantics<parallel>, #tpu.dimension_semantics<arbitrary>], iteration_bounds = array<i64: 2, 1>, scalar_prefetch = 0 : i64, scratch_operands = 0 : i64, tpu.core_type = #tpu.core_type<tc>, window_params = [{transform_indices = @transform_0, window_bounds = array<i64: 8, 32>}, {transform_indices = @transform_1, window_bounds = array<i64: 32, 128>}, {transform_indices = @transform_2, window_bounds = array<i64: 1, 128>}, {transform_indices = @transform_3, window_bounds = array<i64: 128, 128>}, {pipeline_mode = #tpu.pipeline_mode<synchronous>, transform_indices = @transform_4, window_bounds = array<i64: 1, 128>}, {transform_indices = @transform_5, window_bounds = array<i64: 8, 128>}]} {
    %c0_i32 = arith.constant 0 : i32
    %0 = arith.cmpi eq, %arg1, %c0_i32 : i32
    %1 = arith.extui %0 : i1 to i32
    %c0_i32_0 = arith.constant 0 : i32
    %2 = arith.cmpi ne, %1, %c0_i32_0 : i32
    scf.if %2 {
      %cst_18 = arith.constant 0.000000e+00 : f32
      %27 = vector.broadcast %cst_18 : f32 to vector<8x128xf32>
      %c0_19 = arith.constant 0 : index
      %c0_20 = arith.constant 0 : index
      %28 = vector.load %arg7[%c0_19, %c0_20] : memref<8x128xf32, #tpu.memory_space<vmem>>, vector<8x128xf32>
      tpu.vector_store %arg7[%c0_19, %c0_20], %27 {strides = array<i32>} : memref<8x128xf32, #tpu.memory_space<vmem>>, vector<8x128xf32>,
    } else {
    }
    %c0 = arith.constant 0 : index
    %c0_1 = arith.constant 0 : index
    %3 = vector.load %arg2[%c0, %c0_1] : memref<8x32xf32, #tpu.memory_space<vmem>>, vector<8x32xf32>
    %4 = arith.truncf %3 : vector<8x32xf32> to vector<8x32xbf16>
    %c0_2 = arith.constant 0 : index
    %c0_3 = arith.constant 0 : index
    %5 = vector.load %arg3[%c0_2, %c0_3] : memref<32x128xbf16, #tpu.memory_space<vmem>>, vector<32x128xbf16>
    %cst = arith.constant dense<0.000000e+00> : vector<8x128xf32>
    %6 = tpu.matmul %4, %5, %cst {dimension_numbers = #tpu.dot_dimension_numbers<[1], [0], [0], [1], [0, 0, 1, 1], [], []>} : vector<8x32xbf16>, vector<32x128xbf16>, vector<8x128xf32> -> vector<8x128xf32>
    %c0_4 = arith.constant 0 : index
    %c0_5 = arith.constant 0 : index
    %7 = vector.load %arg4[%c0_4, %c0_5] : memref<1x128xf32, #tpu.memory_space<vmem>>, vector<1x128xf32>
    %8 = vector.broadcast %7 : vector<1x128xf32> to vector<8x128xf32>
    %9 = arith.addf %6, %8 : vector<8x128xf32>
    %cst_6 = arith.constant 5.000000e-01 : f32
    %10 = vector.broadcast %cst_6 : f32 to vector<8x128xf32>
    %11 = arith.mulf %10, %9 : vector<8x128xf32>
    %cst_7 = arith.constant 0.707106769 : f32
    %12 = vector.broadcast %cst_7 : f32 to vector<8x128xf32>
    %13 = arith.mulf %9, %12 : vector<8x128xf32>
    %14 = math.erf %13 : vector<8x128xf32>
    %cst_8 = arith.constant 1.000000e+00 : f32
    %15 = vector.broadcast %cst_8 : f32 to vector<8x128xf32>
    %16 = arith.addf %15, %14 : vector<8x128xf32>
    %17 = arith.mulf %11, %16 : vector<8x128xf32>
    %c0_9 = arith.constant 0 : index
    %c0_10 = arith.constant 0 : index
    %18 = vector.load %arg7[%c0_9, %c0_10] : memref<8x128xf32, #tpu.memory_space<vmem>>, vector<8x128xf32>
    %19 = arith.truncf %17 : vector<8x128xf32> to vector<8x128xbf16>
    %c0_11 = arith.constant 0 : index
    %c0_12 = arith.constant 0 : index
    %20 = vector.load %arg5[%c0_11, %c0_12] : memref<128x128xbf16, #tpu.memory_space<vmem>>, vector<128x128xbf16>
    %cst_13 = arith.constant dense<0.000000e+00> : vector<8x128xf32>
    %21 = tpu.matmul %19, %20, %cst_13 {dimension_numbers = #tpu.dot_dimension_numbers<[1], [0], [0], [1], [0, 0, 1, 1], [], []>} : vector<8x128xbf16>, vector<128x128xbf16>, vector<8x128xf32> -> vector<8x128xf32>
    %22 = arith.addf %18, %21 : vector<8x128xf32>
    %c0_14 = arith.constant 0 : index
    %c0_15 = arith.constant 0 : index
    %23 = vector.load %arg7[%c0_14, %c0_15] : memref<8x128xf32, #tpu.memory_space<vmem>>, vector<8x128xf32>
    tpu.vector_store %arg7[%c0_14, %c0_15], %22 {strides = array<i32>} : memref<8x128xf32, #tpu.memory_space<vmem>>, vector<8x128xf32>,
    %c0_i32_16 = arith.constant 0 : i32
    %24 = arith.cmpi eq, %arg1, %c0_i32_16 : i32
    %25 = arith.extui %24 : i1 to i32
    %c0_i32_17 = arith.constant 0 : i32
    %26 = arith.cmpi ne, %25, %c0_i32_17 : i32
    scf.if %26 {
      %c0_18 = arith.constant 0 : index
      %c0_19 = arith.constant 0 : index
      %27 = vector.load %arg7[%c0_18, %c0_19] : memref<8x128xf32, #tpu.memory_space<vmem>>, vector<8x128xf32>
      %c0_20 = arith.constant 0 : index
      %c0_21 = arith.constant 0 : index
      %28 = vector.load %arg6[%c0_20, %c0_21] : memref<1x128xf32, #tpu.memory_space<vmem>>, vector<1x128xf32>
      %29 = vector.broadcast %28 : vector<1x128xf32> to vector<8x128xf32>
      %30 = arith.addf %27, %29 : vector<8x128xf32>
      %c0_22 = arith.constant 0 : index
      %c0_23 = arith.constant 0 : index
      %31 = vector.load %arg7[%c0_22, %c0_23] : memref<8x128xf32, #tpu.memory_space<vmem>>, vector<8x128xf32>
      tpu.vector_store %arg7[%c0_22, %c0_23], %30 {strides = array<i32>} : memref<8x128xf32, #tpu.memory_space<vmem>>, vector<8x128xf32>,
    } else {
    }
    return
  }
  func.func @transform_0(%arg0: i32, %arg1: i32) -> (i32, i32) {
    %c0_i32 = arith.constant 0 : i32
    %c0_i32_0 = arith.constant 0 : i32
    return %arg0, %c0_i32 : i32, i32
  }
  func.func @transform_1(%arg0: i32, %arg1: i32) -> (i32, i32) {
    %c0_i32 = arith.constant 0 : i32
    %c0_i32_0 = arith.constant 0 : i32
    return %c0_i32, %arg1 : i32, i32
  }
  func.func @transform_2(%arg0: i32, %arg1: i32) -> (i32, i32) {
    %c0_i32 = arith.constant 0 : i32
    %c0_i32_0 = arith.constant 0 : i32
    return %c0_i32, %arg1 : i32, i32
  }
  func.func @transform_3(%arg0: i32, %arg1: i32) -> (i32, i32) {
    %c0_i32 = arith.constant 0 : i32
    %c0_i32_0 = arith.constant 0 : i32
    return %arg1, %c0_i32 : i32, i32
  }
  func.func @transform_4(%arg0: i32, %arg1: i32) -> (i32, i32) {
    %c0_i32 = arith.constant 0 : i32
    %c0_i32_0 = arith.constant 0 : i32
    %c0_i32_1 = arith.constant 0 : i32
    return %c0_i32, %c0_i32_0 : i32, i32
  }
  func.func @transform_5(%arg0: i32, %arg1: i32) -> (i32, i32) {
    %c0_i32 = arith.constant 0 : i32
    %c0_i32_0 = arith.constant 0 : i32
    return %arg0, %c0_i32 : i32, i32
  }
}

</mosaic_0001>

<llo_original>
// kernel: tpu_custom_call.1
$region0: #{tpu_custom_call.1}
  #allocation0 [shape = 'u32[]', space=smem, size = 0x4, offset = 0x4, fixed_abs, tag = 'smem constant byte address 0x4 - core index']
  #allocation1 [shape = 'u32[144,128]{1,0:T(1,128)}', space=vmem, size = 0x12000, scoped, tag = 'internal scratch']
  %s0 = inlined_call_operand.hbm [shape: f32[16,32], index: 0, kind: input, shape index: {}]
  %s1 = inlined_call_operand.hbm [shape: bf16[32,128], index: 1, kind: input, shape index: {}]
  %s2 = inlined_call_operand.hbm [shape: f32[1,128], index: 2, kind: input, shape index: {}]
  %s3 = inlined_call_operand.hbm [shape: bf16[128,128], index: 3, kind: input, shape index: {}]
  %s4 = inlined_call_operand.hbm [shape: f32[1,128], index: 4, kind: input, shape index: {}]
  %s5 = inlined_call_operand.hbm [shape: f32[16,128], index: 5, kind: output, shape index: {}]
  %s6 = sld [smem:[#allocation0]]
  $region81: #{tpu_custom_call.1} parent=0
    _
  %s8 = ssub.s32 1, %s6
  %s9 = scalar_select 0, %s8, %s6
  $region1: #{tpu_custom_call.1} parent=0
    #allocation2 [shape = 'u8[8192]{0}', space=vmem, size = 0x2000, scoped, tag = 'input window, operand 0']
    #allocation3 [shape = 's32[2]{0}', space=sflag, size = 0x8, scoped, tag = 'scoped memory for tpu_custom_call.1']
    #allocation4 [shape = 's32[2]{0}', space=sflag, size = 0x8, scoped, tag = 'scoped memory for tpu_custom_call.1']
    #allocation5 [shape = 'u8[8192]{0}', space=vmem, size = 0x2000, scoped, tag = 'input window, operand 1, single buffered']
    #allocation6 [shape = 's32[1]{0}', space=sflag, size = 0x4, scoped, tag = 'scoped memory for tpu_custom_call.1']
    #allocation7 [shape = 'u8[512]{0}', space=vmem, size = 0x400, scoped, tag = 'input window, operand 2, single buffered']
    #allocation8 [shape = 'u8[32768]{0}', space=vmem, size = 0x8000, scoped, tag = 'input window, operand 3, single buffered']
    #allocation9 [shape = 's32[1]{0}', space=sflag, size = 0x4, scoped, tag = 'scoped memory for tpu_custom_call.1']
    #allocation10 [shape = 'u8[512]{0}', space=vmem, size = 0x400, scoped, tag = 'input window, operand 4, single buffered']
    #allocation11 [shape = 'u8[8192]{0}', space=vmem, size = 0x2000, scoped, tag = 'output window, operand 0']
    %10 = vsyncpa [#allocation3], 0
    %s11 = scalar_lea.sflag [#allocation3], 1
    %12 = vsyncpa %s11, 0
    %13 = vsyncpa [#allocation6], 0
    %14 = vsyncpa [#allocation9], 0
    %15 = vsyncpa [#allocation4], 0
    %s16 = scalar_lea.sflag [#allocation4], 1
    %17 = vsyncpa %s16, 0
    loop: start=0, step=1, limit=4
    $region2: #{tpu_custom_call.1} parent=1 // loop_pre_header
      _
    $region3: #{tpu_custom_call.1} parent=1 // loop_header
      %s19 = sphi 0, %s23
      %p20 = scmp.ge.s32.totalorder %s19, 4
      %s26 = sphi 0, %s38
      %s27 = sphi 0, %s34
      %s28 = sphi 0, %s26
      %s29 = sphi 0, %s27
      %s30 = sphi 0, %s28
      %s31 = sphi 0, %s29
      %s41 = sphi 0, %s43
      %s44 = sphi 0, %s41
      %s45 = sphi 0, %s44
      %s61 = sphi 0, %s45
      %s67 = sphi 0, %s69
      %s70 = sphi 0, %s67
      %s71 = sphi 0, %s70
      %s87 = sphi 0, %s71
      %s93 = sphi 0, %s95
      %s96 = sphi 0, %s93
      %s97 = sphi 0, %s96
      %s113 = sphi 0, %s97
      %s119 = sphi 0, %s121
      %s122 = sphi 0, %s119
      %s123 = sphi 0, %s122
      %s139 = sphi 0, %s123
      %s143 = sphi 0, %s143
      %s145 = sphi 0, %s143
      %s146 = sphi 0, %s145
      %s160 = sphi 0, %s146
      %s166 = sphi 0, %s168
      %s169 = sphi 0, %s166
      %s170 = sphi 0, %s169
      %s186 = sphi 0, %s170
    $region4: #{tpu_custom_call.1} parent=1 // loop_header_branch
      %22 = sbr.rel (%p20) target = $region8
    $region5: #{tpu_custom_call.1} parent=1 // loop_body
      %s24 = ssub.s32 %s19, 1
      %s25 = ssub.s32 %s19, 2
      %s32 = sadd.s32 1, %s27
      %p33 = scmp.ge.s32.totalorder %s32, 1
      %s34 = scalar_select %p33, 0, %s32
      %s35 = sadd.s32 1, %s26
      %s36 = scalar_select %p33, %s35, %s26
      %p37 = scmp.ge.s32.totalorder %s36, 2
      %s38 = scalar_select %p37, 0, %s36
      %s39 = ssub.s32 %s26, %s38
      %p40 = scmp.eq.s32.totalorder %s39, 0
      %s42 = sadd.s32 %s41, 1
      %s43 = scalar_select %p40, %s41, %s42
      %p46 = pneg %p40
      %p47 = scmp.eq.s32.totalorder %s19, 1
      %p48 = por %p46, %p47
      %p49 = scmp.ne.s32.totalorder %s41, %s44
      %p50 = scmp.eq.s32.totalorder %s19, 0
      %p51 = por %p49, %p50
      %p52 = scmp.ne.s32.totalorder %s41, %s44
      %p53 = scmp.eq.s32.totalorder %s24, 1
      %p54 = por %p52, %p53
      %p55 = scmp.ne.s32.totalorder %s44, %s45
      %p56 = scmp.eq.s32.totalorder %s24, 0
      %p57 = por %p55, %p56
      %p58 = scmp.ne.s32.totalorder %s44, %s45
      %p59 = scmp.eq.s32.totalorder %s25, 1
      %p60 = por %p58, %p59
      %p62 = scmp.ne.s32.totalorder %s45, %s61
      %p63 = scmp.eq.s32.totalorder %s25, 0
      %p64 = por %p62, %p63
      %s65 = ssub.s32 %s27, %s34
      %p66 = scmp.eq.s32.totalorder %s65, 0
      %s68 = sadd.s32 %s67, 1
      %s69 = scalar_select %p66, %s67, %s68
      %p72 = pneg %p66
      %p73 = scmp.eq.s32.totalorder %s19, 1
      %p74 = por %p72, %p73
      %p75 = scmp.ne.s32.totalorder %s67, %s70
      %p76 = scmp.eq.s32.totalorder %s19, 0
      %p77 = por %p75, %p76
      %p78 = scmp.ne.s32.totalorder %s67, %s70
      %p79 = scmp.eq.s32.totalorder %s24, 1
      %p80 = por %p78, %p79
      %p81 = scmp.ne.s32.totalorder %s70, %s71
      %p82 = scmp.eq.s32.totalorder %s24, 0
      %p83 = por %p81, %p82
      %p84 = scmp.ne.s32.totalorder %s70, %s71
      %p85 = scmp.eq.s32.totalorder %s25, 1
      %p86 = por %p84, %p85
      %p88 = scmp.ne.s32.totalorder %s71, %s87
      %p89 = scmp.eq.s32.totalorder %s25, 0
      %p90 = por %p88, %p89
      %s91 = ssub.s32 %s27, %s34
      %p92 = scmp.eq.s32.totalorder %s91, 0
      %s94 = sadd.s32 %s93, 1
      %s95 = scalar_select %p92, %s93, %s94
      %p98 = pneg %p92
      %p99 = scmp.eq.s32.totalorder %s19, 1
      %p100 = por %p98, %p99
      %p101 = scmp.ne.s32.totalorder %s93, %s96
      %p102 = scmp.eq.s32.totalorder %s19, 0
      %p103 = por %p101, %p102
      %p104 = scmp.ne.s32.totalorder %s93, %s96
      %p105 = scmp.eq.s32.totalorder %s24, 1
      %p106 = por %p104, %p105
      %p107 = scmp.ne.s32.totalorder %s96, %s97
      %p108 = scmp.eq.s32.totalorder %s24, 0
      %p109 = por %p107, %p108
      %p110 = scmp.ne.s32.totalorder %s96, %s97
      %p111 = scmp.eq.s32.totalorder %s25, 1
      %p112 = por %p110, %p111
      %p114 = scmp.ne.s32.totalorder %s97, %s113
      %p115 = scmp.eq.s32.totalorder %s25, 0
      %p116 = por %p114, %p115
      %s117 = ssub.s32 %s27, %s34
      %p118 = scmp.eq.s32.totalorder %s117, 0
      %s120 = sadd.s32 %s119, 1
      %s121 = scalar_select %p118, %s119, %s120
      %p124 = pneg %p118
      %p125 = scmp.eq.s32.totalorder %s19, 1
      %p126 = por %p124, %p125
      %p127 = scmp.ne.s32.totalorder %s119, %s122
      %p128 = scmp.eq.s32.totalorder %s19, 0
      %p129 = por %p127, %p128
      %p130 = scmp.ne.s32.totalorder %s119, %s122
      %p131 = scmp.eq.s32.totalorder %s24, 1
      %p132 = por %p130, %p131
      %p133 = scmp.ne.s32.totalorder %s122, %s123
      %p134 = scmp.eq.s32.totalorder %s24, 0
      %p135 = por %p133, %p134
      %p136 = scmp.ne.s32.totalorder %s122, %s123
      %p137 = scmp.eq.s32.totalorder %s25, 1
      %p138 = por %p136, %p137
      %p140 = scmp.ne.s32.totalorder %s123, %s139
      %p141 = scmp.eq.s32.totalorder %s25, 0
      %p142 = por %p140, %p141
      %s144 = sadd.s32 %s143, 1
      %p147 = scmp.eq.s32.totalorder %s19, 1
      %p148 = scmp.ne.s32.totalorder %s143, %s145
      %p149 = scmp.eq.s32.totalorder %s19, 0
      %p150 = por %p148, %p149
      %p151 = scmp.ne.s32.totalorder %s143, %s145
      %p152 = scmp.eq.s32.totalorder %s24, 1
      %p153 = por %p151, %p152
      %p154 = scmp.ne.s32.totalorder %s145, %s146
      %p155 = scmp.eq.s32.totalorder %s24, 0
      %p156 = por %p154, %p155
      %p157 = scmp.ne.s32.totalorder %s145, %s146
      %p158 = scmp.eq.s32.totalorder %s25, 1
      %p159 = por %p157, %p158
      %p161 = scmp.ne.s32.totalorder %s146, %s160
      %p162 = scmp.eq.s32.totalorder %s25, 0
      %p163 = por %p161, %p162
      %s164 = ssub.s32 %s26, %s38
      %p165 = scmp.eq.s32.totalorder %s164, 0
      %s167 = sadd.s32 %s166, 1
      %s168 = scalar_select %p165, %s166, %s167
      %p171 = pneg %p165
      %p172 = scmp.eq.s32.totalorder %s19, 1
      %p173 = por %p171, %p172
      %p174 = scmp.ne.s32.totalorder %s166, %s169
      %p175 = scmp.eq.s32.totalorder %s19, 0
      %p176 = por %p174, %p175
      %p177 = scmp.ne.s32.totalorder %s166, %s169
      %p178 = scmp.eq.s32.totalorder %s24, 1
      %p179 = por %p177, %p178
      %p180 = scmp.ne.s32.totalorder %s169, %s170
      %p181 = scmp.eq.s32.totalorder %s24, 0
      %p182 = por %p180, %p181
      %p183 = scmp.ne.s32.totalorder %s169, %s170
      %p184 = scmp.eq.s32.totalorder %s25, 1
      %p185 = por %p183, %p184
      %p187 = scmp.ne.s32.totalorder %s170, %s186
      %p188 = scmp.eq.s32.totalorder %s25, 0
      %p189 = por %p187, %p188
      %p190 = scmp.le.s32.totalorder 1, %s19
      %p191 = scmp.lt.s32.totalorder %s19, 3
      %p192 = pnand %p190, %p191
      %p193 = pneg %p192
      // Predicated region
      $region9: #{tpu_custom_call.1} parent=5 // pred_check
        _
      $region10: #{tpu_custom_call.1} parent=5 // pred_check_branch
        %195 = sbr.rel (%p192) target = $region12
      $region11: #{tpu_custom_call.1} parent=5 // pred_region
        %s196 = ssub.s32 %s19, 1
        // Predicated region
        $region13: #{tpu_custom_call.1} parent=11 // pred_check
          %p197 = pneg %p83
        $region14: #{tpu_custom_call.1} parent=11 // pred_check_branch
          %199 = sbr.rel (%p197) target = $region16
        $region15: #{tpu_custom_call.1} parent=11 // pred_region
          %s201 = ssub.s32 256, 256
          %202 = vsyncadd [#allocation6], %s201
          %s203 = smul.addr %s29, 64
          %s204 = scalar_lea.hbm %s1, %s203
          %s205 = sshll.u32 [#allocation5], 4
          %s206 = int_to_ptr.vmem [resolvable:$true] %s205
          %211 = dma.hbm_to_vmem [thread:$0]  %s204, 256, %s206, [#allocation6], 64, 64, 4
        $region16: #{tpu_custom_call.1} parent=11 // pred_fallthru
          _
        // Predicated region
        $region17: #{tpu_custom_call.1} parent=11 // pred_check
          %p212 = pneg %p109
        $region18: #{tpu_custom_call.1} parent=11 // pred_check_branch
          %214 = sbr.rel (%p212) target = $region20
        $region19: #{tpu_custom_call.1} parent=11 // pred_region
          %s216 = ssub.s32 16, 16
          %217 = vsyncadd [#allocation6], %s216
          %s218 = smul.addr %s29, 16
          %s219 = scalar_lea.hbm %s2, %s218
          %s221 = sshll.u32 [#allocation7], 4
          %s222 = int_to_ptr.vmem [resolvable:$true] %s221
          %224 = dma.hbm_to_vmem [thread:$0]  %s219, 16, %s222, [#allocation6]
        $region20: #{tpu_custom_call.1} parent=11 // pred_fallthru
          _
        // Predicated region
        $region21: #{tpu_custom_call.1} parent=11 // pred_check
          %p225 = pneg %p135
        $region22: #{tpu_custom_call.1} parent=11 // pred_check_branch
          %227 = sbr.rel (%p225) target = $region24
        $region23: #{tpu_custom_call.1} parent=11 // pred_region
          %s228 = smul.u32 16, %s29
          %s230 = ssub.s32 1024, 1024
          %231 = vsyncadd [#allocation9], %s230
          %s232 = smul.addr %s228, 64
          %s233 = scalar_lea.hbm %s3, %s232
          %s234 = sshll.u32 [#allocation8], 4
          %s235 = int_to_ptr.vmem [resolvable:$true] %s234
          %240 = dma.hbm_to_vmem [thread:$0]  %s233, 1024, %s235, [#allocation9], 64, 64, 4
        $region24: #{tpu_custom_call.1} parent=11 // pred_fallthru
          _
        // Predicated region
        $region25: #{tpu_custom_call.1} parent=11 // pred_check
          %p241 = pneg %p156
        $region26: #{tpu_custom_call.1} parent=11 // pred_check_branch
          %243 = sbr.rel (%p241) target = $region28
        $region27: #{tpu_custom_call.1} parent=11 // pred_region
          %s245 = ssub.s32 16, 16
          %246 = vsyncadd [#allocation9], %s245
          %s248 = sshll.u32 [#allocation10], 4
          %s249 = int_to_ptr.vmem [resolvable:$true] %s248
          %251 = dma.hbm_to_vmem [thread:$0]  %s4, 16, %s249, [#allocation9]
        $region28: #{tpu_custom_call.1} parent=11 // pred_fallthru
          _
      $region12: #{tpu_custom_call.1} parent=5 // pred_fallthru
        _
      %p252 = scmp.lt.s32.totalorder %s19, 2
      // Predicated region
      $region29: #{tpu_custom_call.1} parent=5 // pred_check
        %p253 = pneg %p252
      $region30: #{tpu_custom_call.1} parent=5 // pred_check_branch
        %255 = sbr.rel (%p253) target = $region32
      $region31: #{tpu_custom_call.1} parent=5 // pred_region
        // Predicated region
        $region33: #{tpu_custom_call.1} parent=31 // pred_check
          %p256 = pneg %p51
        $region34: #{tpu_custom_call.1} parent=31 // pred_check_branch
          %258 = sbr.rel (%p256) target = $region36
        $region35: #{tpu_custom_call.1} parent=31 // pred_region
          %s259 = sand.u32 %s41, 1
          %s260 = scalar_lea.sflag [#allocation3], %s259
          %s261 = sand.u32 %s41, 1
          %s262 = smul.addr %s261, 8
          %s263 = scalar_lea.vmem [#allocation2], %s262
          %s265 = ssub.s32 128, 128
          %266 = vsyncadd %s260, %s265
          %s267 = smul.addr %s26, 128
          %s268 = scalar_lea.hbm %s0, %s267
          %s270 = sshll.u32 %s263, 4
          %s271 = int_to_ptr.vmem [resolvable:$true] %s270
          %273 = dma.hbm_to_vmem [thread:$0]  %s268, 128, %s271, %s260
        $region36: #{tpu_custom_call.1} parent=31 // pred_fallthru
          _
      $region32: #{tpu_custom_call.1} parent=5 // pred_fallthru
        _
      %p274 = scmp.le.s32.totalorder 1, %s19
      %p275 = scmp.lt.s32.totalorder %s19, 3
      %p276 = pnand %p274, %p275
      %p277 = pneg %p276
      // Predicated region
      $region37: #{tpu_custom_call.1} parent=5 // pred_check
        _
      $region38: #{tpu_custom_call.1} parent=5 // pred_check_branch
        %279 = sbr.rel (%p276) target = $region40
      $region39: #{tpu_custom_call.1} parent=5 // pred_region
        %s280 = ssub.s32 %s19, 1
        %s281 = sand.u32 %s44, 1
        %s282 = scalar_lea.sflag [#allocation3], %s281
        %s283 = sand.u32 %s44, 1
        %s284 = smul.addr %s283, 8
        %s285 = scalar_lea.vmem [#allocation2], %s284
        // Predicated region
        $region41: #{tpu_custom_call.1} parent=39 // pred_check
          %p286 = pneg %p57
        $region42: #{tpu_custom_call.1} parent=39 // pred_check_branch
          %288 = sbr.rel (%p286) target = $region44
        $region43: #{tpu_custom_call.1} parent=39 // pred_region
          %289 = dma.done %s282, 128
        $region44: #{tpu_custom_call.1} parent=39 // pred_fallthru
          _
        // Predicated region
        $region45: #{tpu_custom_call.1} parent=39 // pred_check
          %p290 = pneg %p83
        $region46: #{tpu_custom_call.1} parent=39 // pred_check_branch
          %292 = sbr.rel (%p290) target = $region48
        $region47: #{tpu_custom_call.1} parent=39 // pred_region
          %293 = dma.done [#allocation6], 256
        $region48: #{tpu_custom_call.1} parent=39 // pred_fallthru
          _
        // Predicated region
        $region49: #{tpu_custom_call.1} parent=39 // pred_check
          %p294 = pneg %p109
        $region50: #{tpu_custom_call.1} parent=39 // pred_check_branch
          %296 = sbr.rel (%p294) target = $region52
        $region51: #{tpu_custom_call.1} parent=39 // pred_region
          %297 = dma.done [#allocation6], 16
        $region52: #{tpu_custom_call.1} parent=39 // pred_fallthru
          _
        // Predicated region
        $region53: #{tpu_custom_call.1} parent=39 // pred_check
          %p298 = pneg %p135
        $region54: #{tpu_custom_call.1} parent=39 // pred_check_branch
          %300 = sbr.rel (%p298) target = $region56
        $region55: #{tpu_custom_call.1} parent=39 // pred_region
          %301 = dma.done [#allocation9], 1024
        $region56: #{tpu_custom_call.1} parent=39 // pred_fallthru
          _
        // Predicated region
        $region57: #{tpu_custom_call.1} parent=39 // pred_check
          %p302 = pneg %p156
        $region58: #{tpu_custom_call.1} parent=39 // pred_check_branch
          %304 = sbr.rel (%p302) target = $region60
        $region59: #{tpu_custom_call.1} parent=39 // pred_region
          %305 = dma.done [#allocation9], 16
        $region60: #{tpu_custom_call.1} parent=39 // pred_fallthru
          _
        %s306 = sand.u32 %s44, 1
        %s307 = scalar_lea.sflag [#allocation3], %s306
        %s308 = sand.u32 %s44, 1
        %s309 = smul.addr %s308, 8
        %s310 = scalar_lea.vmem [#allocation2], %s309
        %p311 = pneg %p57
        %p312 = pneg %p54
        %p313 = pneg %p83
        %p314 = pneg %p80
        %p315 = pneg %p109
        %p316 = pneg %p106
        %p317 = pneg %p135
        %p318 = pneg %p132
        %p319 = pneg %p156
        %p320 = pneg %p153
        %p321 = pneg %p182
        %p322 = pneg %p179
        %s323 = sand.u32 %s169, 1
        %s324 = scalar_lea.sflag [#allocation4], %s323
        %s325 = sand.u32 %s169, 1
        %s326 = smul.addr %s325, 8
        %s327 = scalar_lea.vmem [#allocation11], %s326
        %s328 = smul.u32 16, %s29
        %p330 = scmp.eq.s32.totalorder %s29, 0
        // Predicated region
        $region61: #{tpu_custom_call.1} parent=39 // pred_check
          %p331 = pneg %p330
        $region62: #{tpu_custom_call.1} parent=39 // pred_check_branch
          %333 = sbr.rel (%p331) target = $region64
        $region63: #{tpu_custom_call.1} parent=39 // pred_region
          %334 = vst [vmem:[%s327] sm:$0xff] 0.0
        $region64: #{tpu_custom_call.1} parent=39 // pred_fallthru
          _
        %v335 = vld [vmem:[%s285] sm:$0xff]
        %v336 = vpack.c.bf16 %v335, %v335
        %v337 = vld [vmem:[#allocation5] sm:$0xf]
        %v338 = vld [vmem:[#allocation5 + $0x4] sm:$0xf]
        %v339 = vld [vmem:[#allocation5 + $0x8] sm:$0xf]
        %v340 = vld [vmem:[#allocation5 + $0xc] sm:$0xf]
        %v341 = vld [vmem:[#allocation7] sm:$0x1]
        %v343 = vlaneseq
        %v344 = vshrl.u32 %v343, 7
        %v345 = vsub.s32 0, %v344
        %v346 = vrot.slane %v341, %v345
        %v352 = vunpack.c.l.b16 %v337
        %v353 = vunpack.c.l.b16 %v338
        %v354 = vunpack.c.l.b16 %v339
        %v355 = vunpack.c.l.b16 %v340
        %v356 = vpack.c.b16 %v353, %v352
        %v357 = vpack.c.b16 %v355, %v354
        %vm360 = vcmask 261120
        %v362 = vsel %vm360, %v336, 0
        %364 = vmatprep.subr.bf16.mxu0 0
        %365 = vmatpush1.bf16.msra.mxu0 %v356
        %366 = vmatprep.subr.bf16.mxu0 0
        %367 = vmatpush1.bf16.msra.mxu0 %v357
        %368 = vmatprep.subr.bf16.mxu0 0
        %369 = vmatpush1.bf16.msra.mxu0 0
        %370 = vmatprep.subr.bf16.mxu0 0
        %371 = vmatpush1.bf16.msra.mxu0 0
        %372 = vmatprep.subr.bf16.mxu0 0
        %373 = vmatpush1.bf16.msra.mxu0 0
        %374 = vmatprep.subr.bf16.mxu0 0
        %375 = vmatpush1.bf16.msra.mxu0 0
        %376 = vmatprep.subr.bf16.mxu0 0
        %377 = vmatpush1.bf16.msra.mxu0 0
        %378 = vmatprep.subr.bf16.mxu0 0
        %379 = vmatpush1.bf16.msra.mxu0 0
        %380 = vmatprep.subr.bf16.mxu0 0
        %381 = vmatpush1.bf16.msra.mxu0 0
        %382 = vmatprep.subr.bf16.mxu0 0
        %383 = vmatpush1.bf16.msra.mxu0 0
        %384 = vmatprep.subr.bf16.mxu0 0
        %385 = vmatpush1.bf16.msra.mxu0 0
        %386 = vmatprep.subr.bf16.mxu0 0
        %387 = vmatpush1.bf16.msra.mxu0 0
        %388 = vmatprep.subr.bf16.mxu0 0
        %389 = vmatpush1.bf16.msra.mxu0 0
        %390 = vmatprep.subr.bf16.mxu0 0
        %391 = vmatpush1.bf16.msra.mxu0 0
        %392 = vmatprep.subr.bf16.mxu0 0
        %393 = vmatpush1.bf16.msra.mxu0 0
        %394 = vmatprep.subr.bf16.mxu0 0
        %395 = vmatpush1.bf16.msra.mxu0 0
        %396 = vmatprep.mubr.bf16.mxu0 0
        %397 = vmatmul.mubr.bf16.gmra.mrb[0].mxu0 %v362
        %v398 = vpop.f32.mrb[0].mxu0
        %v399 = vadd.f32 %v346, %v398
        %v400 = vpop.f32.mrb[0].mxu0
        %v401 = vpop.f32.mrb[0].mxu0
        %v402 = vpop.f32.mrb[0].mxu0
        %403 = vdwg.mxu0
        %v404 = vmul.f32 %v399, 0.5
        %v405 = vmul.f32 %v399, 0.70710677
        %v406 = verf.f32.pop %v405
        %v407 = vadd.f32 %v406, 1.0
        %v408 = vmul.f32 %v404, %v407
        %v409 = vld [vmem:[%s327] sm:$0xff]
        %v410 = vpack.c.bf16 %v408, %v408
        %v411 = vld [vmem:[#allocation8] sm:$0xf]
        %v412 = vld [vmem:[#allocation8 + $0x4] sm:$0xf]
        %v413 = vld [vmem:[#allocation8 + $0x8] sm:$0xf]
        %v414 = vld [vmem:[#allocation8 + $0xc] sm:$0xf]
        %v415 = vld [vmem:[#allocation8 + $0x10] sm:$0xf]
        %v416 = vld [vmem:[#allocation8 + $0x14] sm:$0xf]
        %v417 = vld [vmem:[#allocation8 + $0x18] sm:$0xf]
        %v418 = vld [vmem:[#allocation8 + $0x1c] sm:$0xf]
        %v419 = vld [vmem:[#allocation8 + $0x20] sm:$0xf]
        %v420 = vld [vmem:[#allocation8 + $0x24] sm:$0xf]
        %v421 = vld [vmem:[#allocation8 + $0x28] sm:$0xf]
        %v422 = vld [vmem:[#allocation8 + $0x2c] sm:$0xf]
        %v423 = vld [vmem:[#allocation8 + $0x30] sm:$0xf]
        %v424 = vld [vmem:[#allocation8 + $0x34] sm:$0xf]
        %v425 = vld [vmem:[#allocation8 + $0x38] sm:$0xf]
        %v426 = vld [vmem:[#allocation8 + $0x3c] sm:$0xf]
        %v443 = vunpack.c.l.b16 %v411
        %v444 = vunpack.c.l.b16 %v412
        %v445 = vunpack.c.l.b16 %v413
        %v446 = vunpack.c.l.b16 %v414
        %v447 = vunpack.c.l.b16 %v415
        %v448 = vunpack.c.l.b16 %v416
        %v449 = vunpack.c.l.b16 %v417
        %v450 = vunpack.c.l.b16 %v418
        %v451 = vunpack.c.l.b16 %v419
        %v452 = vunpack.c.l.b16 %v420
        %v453 = vunpack.c.l.b16 %v421
        %v454 = vunpack.c.l.b16 %v422
        %v455 = vunpack.c.l.b16 %v423
        %v456 = vunpack.c.l.b16 %v424
        %v457 = vunpack.c.l.b16 %v425
        %v458 = vunpack.c.l.b16 %v426
        %v459 = vpack.c.b16 %v444, %v443
        %v460 = vpack.c.b16 %v446, %v445
        %v461 = vpack.c.b16 %v448, %v447
        %v462 = vpack.c.b16 %v450, %v449
        %v463 = vpack.c.b16 %v452, %v451
        %v464 = vpack.c.b16 %v454, %v453
        %v465 = vpack.c.b16 %v456, %v455
        %v466 = vpack.c.b16 %v458, %v457
        %475 = vmatprep.subr.bf16.mxu0 0
        %476 = vmatpush1.bf16.msra.mxu0 %v459
        %477 = vmatprep.subr.bf16.mxu0 0
        %478 = vmatpush1.bf16.msra.mxu0 %v460
        %479 = vmatprep.subr.bf16.mxu0 0
        %480 = vmatpush1.bf16.msra.mxu0 %v461
        %481 = vmatprep.subr.bf16.mxu0 0
        %482 = vmatpush1.bf16.msra.mxu0 %v462
        %483 = vmatprep.subr.bf16.mxu0 0
        %484 = vmatpush1.bf16.msra.mxu0 %v463
        %485 = vmatprep.subr.bf16.mxu0 0
        %486 = vmatpush1.bf16.msra.mxu0 %v464
        %487 = vmatprep.subr.bf16.mxu0 0
        %488 = vmatpush1.bf16.msra.mxu0 %v465
        %489 = vmatprep.subr.bf16.mxu0 0
        %490 = vmatpush1.bf16.msra.mxu0 %v466
        %491 = vmatprep.subr.bf16.mxu0 0
        %492 = vmatpush1.bf16.msra.mxu0 0
        %493 = vmatprep.subr.bf16.mxu0 0
        %494 = vmatpush1.bf16.msra.mxu0 0
        %495 = vmatprep.subr.bf16.mxu0 0
        %496 = vmatpush1.bf16.msra.mxu0 0
        %497 = vmatprep.subr.bf16.mxu0 0
        %498 = vmatpush1.bf16.msra.mxu0 0
        %499 = vmatprep.subr.bf16.mxu0 0
        %500 = vmatpush1.bf16.msra.mxu0 0
        %501 = vmatprep.subr.bf16.mxu0 0
        %502 = vmatpush1.bf16.msra.mxu0 0
        %503 = vmatprep.subr.bf16.mxu0 0
        %504 = vmatpush1.bf16.msra.mxu0 0
        %505 = vmatprep.subr.bf16.mxu0 0
        %506 = vmatpush1.bf16.msra.mxu0 0
        %507 = vmatprep.mubr.bf16.mxu0 0
        %508 = vmatmul.mubr.bf16.gmra.mrb[0].mxu0 %v410
        %v509 = vpop.f32.mrb[0].mxu0
        %v510 = vadd.f32 0.0, %v509
        %v511 = vpop.f32.mrb[0].mxu0
        %v512 = vpop.f32.mrb[0].mxu0
        %v513 = vpop.f32.mrb[0].mxu0
        %514 = vdwg.mxu0
        %v515 = vadd.f32 %v409, %v510
        %516 = vst [vmem:[%s327] sm:$0xff] %v515
        // Predicated region
        $region65: #{tpu_custom_call.1} parent=39 // pred_check
          %p517 = pneg %p330
        $region66: #{tpu_custom_call.1} parent=39 // pred_check_branch
          %519 = sbr.rel (%p517) target = $region68
        $region67: #{tpu_custom_call.1} parent=39 // pred_region
          %v520 = vld [vmem:[%s327] sm:$0xff]
          %v521 = vld [vmem:[#allocation10] sm:$0x1]
          %v523 = vlaneseq
          %v524 = vshrl.u32 %v523, 7
          %v525 = vsub.s32 0, %v524
          %v526 = vrot.slane %v521, %v525
          %v528 = vadd.f32 %v520, %v526
          %529 = vst [vmem:[%s327] sm:$0xff] %v528
        $region68: #{tpu_custom_call.1} parent=39 // pred_fallthru
          _
        %s530 = sand.u32 %s169, 1
        %s531 = scalar_lea.sflag [#allocation4], %s530
        %s532 = sand.u32 %s169, 1
        %s533 = smul.addr %s532, 8
        %s534 = scalar_lea.vmem [#allocation11], %s533
        // Predicated region
        $region69: #{tpu_custom_call.1} parent=39 // pred_check
          %p535 = pneg %p179
        $region70: #{tpu_custom_call.1} parent=39 // pred_check_branch
          %537 = sbr.rel (%p535) target = $region72
        $region71: #{tpu_custom_call.1} parent=39 // pred_region
          %s539 = ssub.s32 128, 128
          %540 = vsyncadd %s531, %s539
          %s541 = smul.addr %s28, 128
          %s542 = scalar_lea.hbm %s5, %s541
          %s544 = sshll.u32 %s534, 4
          %s545 = int_to_ptr.vmem [resolvable:$true] %s544
          %547 = dma.vmem_to_hbm [thread:$0]  %s545, 128, %s542, %s531
        $region72: #{tpu_custom_call.1} parent=39 // pred_fallthru
          _
      $region40: #{tpu_custom_call.1} parent=5 // pred_fallthru
        _
      %p548 = scmp.le.s32.totalorder 2, %s19
      // Predicated region
      $region73: #{tpu_custom_call.1} parent=5 // pred_check
        %p549 = pneg %p548
      $region74: #{tpu_custom_call.1} parent=5 // pred_check_branch
        %551 = sbr.rel (%p549) target = $region76
      $region75: #{tpu_custom_call.1} parent=5 // pred_region
        %s552 = ssub.s32 %s19, 2
        // Predicated region
        $region77: #{tpu_custom_call.1} parent=75 // pred_check
          %p553 = pneg %p185
        $region78: #{tpu_custom_call.1} parent=75 // pred_check_branch
          %555 = sbr.rel (%p553) target = $region80
        $region79: #{tpu_custom_call.1} parent=75 // pred_region
          %s556 = sand.u32 %s170, 1
          %s557 = scalar_lea.sflag [#allocation4], %s556
          %s558 = sand.u32 %s170, 1
          %s559 = smul.addr %s558, 8
          %s560 = scalar_lea.vmem [#allocation11], %s559
          %561 = dma.done %s557, 128
        $region80: #{tpu_custom_call.1} parent=75 // pred_fallthru
          _
      $region76: #{tpu_custom_call.1} parent=5 // pred_fallthru
        _
    $region6: #{tpu_custom_call.1} parent=1 // loop_footer
      %s23 = sadd.s32 1, %s19
    $region7: #{tpu_custom_call.1} parent=1 // loop_footer_branch
      %18 = sbr.rel target = $region3
    $region8: #{tpu_custom_call.1} parent=1 // loop_exit
      _
    %562 = vsyncpa [#allocation3], 1
    %s563 = scalar_lea.sflag [#allocation3], 1
    %564 = vsyncpa %s563, 1
    %565 = vsyncpa [#allocation6], 1
    %566 = vsyncpa [#allocation9], 1
    %567 = vsyncpa [#allocation4], 1
    %s568 = scalar_lea.sflag [#allocation4], 1
    %569 = vsyncpa %s568, 1

</llo_original>
